<compile_context>
chip_gen: v6e
topology: v6e:2x2x1
jax: 0.10.0
libtpu: 0.0.40
codegen_flags: <defaults>
</compile_context>

<pallas_src>
from functools import partial

import jax
import jax.numpy as jnp
from jax.experimental import pallas as pl
from jax.experimental.pallas import tpu as pltpu

_LANES = 128            # TPU vreg lane count
_MAX_TILE_ROWS = 4096   # bounds the (tile, 128) relayout intermediates (<= 2 MiB each)


def _accuracy_kernel(logits_ref, tgt_ref, correct_ref):
    """One sample-tile: row argmax (first occurrence on ties) vs. target."""
    x = logits_ref[...]                                   # (tile, C), native dtype
    tile, c = x.shape

    # Row-wise argmax with torch's tie-break (lowest index wins).
    max_val = jnp.max(x, axis=1, keepdims=True)           # (tile, 1)
    col = jax.lax.broadcasted_iota(jnp.int32, (tile, c), 1)
    is_max = x == max_val
    pred = jnp.min(jnp.where(is_max, col, c), axis=1, keepdims=True)   # (tile, 1) i32
    # TODO(synk): NaN rows give pred = C (counted wrong); torch.argmax returns the NaN's index.

    # Sublane -> lane relayout so the output block is lane-dense: broadcast the
    # per-row column across all 128 lanes, one fully (8,128)-aligned XLU
    # transpose, keep sublane 0.  Done in f32 (indices < 2^24 on the kernel
    # path, so the equality compare below is exact).
    pred_wide = jnp.broadcast_to(pred.astype(jnp.float32), (tile, _LANES))
    pred_row = jnp.transpose(pred_wide)[0:1, :]            # (1, tile)

    correct_ref[...] = (pred_row == tgt_ref[...].astype(jnp.float32)
                        ).astype(jnp.float32)              # (1, tile), lane-dense


def _block_budget_bytes():
    """Per-generation logits-block byte budget (Pallas double-buffers it)."""
    try:
        kind = jax.devices()[0].device_kind.lower()
    except Exception:
        kind = ""
    if "v5 lite" in kind or "v5e" in kind or "v5lite" in kind:
        return 1_310_720          # ~1.25 MiB: v5e (16 MiB scoped-VMEM default, ~820 GB/s HBM)
    return 2_621_440              # ~2.5 MiB: v6e/v7x (measured ~85%+ of HBM roofline at this size)


def _choose_tile_rows(n, c, itemsize, budget):
    """Largest 128-aligned row tile that (a) keeps one logits block inside the
    byte budget, (b) stays <= N, (c) leaves >= 2 grid steps when N allows (so
    ("parallel",) shards across both v7x TensorCores), (d) bounds the relayout
    intermediates.  128-alignment also covers bf16/int8 sublane packing."""
    tile = budget // max(1, c * itemsize)
    tile = min(tile, _MAX_TILE_ROWS, (n // _LANES) * _LANES)
    if n >= 2 * _LANES:
        tile = min(tile, max(_LANES, ((n // 2) // _LANES) * _LANES))
    return max(_LANES, (tile // _LANES) * _LANES)


def _vmem_limit_bytes(tile, c, itemsize):
    """Generous scoped-VMEM request: double-buffered logits block, widened
    argmax temporaries, relayout buffers, small I/O blocks, slack.  Clamped to
    48 MiB (< the 64 MiB physical VMEM of a v7x TensorCore)."""
    need = (2 * tile * c * itemsize      # double-buffered input block
            + 5 * tile * c * 4           # i32/f32 argmax temporaries (iota/mask/where)
            + 3 * tile * _LANES * 4      # relayout broadcast + transpose
            + 4 * tile * 4               # target / output blocks (double-buffered)
            + (2 << 20))                 # slack
    return int(min(48 * 2**20, max(16 * 2**20, need)))


def _argmax_correct(output, target):
    """Per-sample correctness flags (pred == target), shape (N,), f32."""
    n, c = output.shape
    tgt = target.astype(jnp.int32)

    itemsize = output.dtype.itemsize
    budget = _block_budget_bytes()
    if c < _LANES or n < _LANES or _LANES * c * itemsize > budget:
        # Tiny C/N (few useful lanes) or huge C (a single 128-row block would
        # blow the VMEM budget): plain XLA argmax is the right tool there.
        return (jnp.argmax(output, axis=1) == tgt).astype(jnp.float32)

    tile = _choose_tile_rows(n, c, itemsize, budget)
    n_tiles = pl.cdiv(n, tile)
    n_pad = n_tiles * tile

    # Logits are NOT padded/copied: the trailing partial block reads garbage
    # rows whose results are discarded by the [:n] slice below.  Only the tiny
    # int32 target vector is padded, and it streams lane-dense as (1, n_pad).
    if n_pad != n:
        tgt = jnp.pad(tgt, (0, n_pad - n), constant_values=-1)
    tgt_row = tgt.reshape(1, n_pad)

    correct = pl.pallas_call(
        _accuracy_kernel,
        grid=(n_tiles,),
        in_specs=[
            pl.BlockSpec((tile, c), lambda i: (i, 0)),     # logits tile (native dtype)
            pl.BlockSpec((1, tile), lambda i: (0, i)),     # lane-dense targets
        ],
        out_specs=pl.BlockSpec((1, tile), lambda i: (0, i)),
        out_shape=jax.ShapeDtypeStruct((1, n_pad), jnp.float32),
        compiler_params=pltpu.CompilerParams(
            dimension_semantics=("parallel",),             # megacore sharding on v7x
            vmem_limit_bytes=_vmem_limit_bytes(tile, c, itemsize)),
    )(output, tgt_row)
    return correct.reshape(-1)[:n]


@partial(jax.jit, donate_argnums=(2, 3))
def _accuracy_step(output, target, t_prev, f_prev):
    """One metric update: pallas argmax/compare + fused T/F/metric math."""
    correct = _argmax_correct(output, target)              # (N,) f32
    t_new = t_prev + correct
    f_new = f_prev + (1.0 - correct)
    metric = t_new / (f_new + t_new + 1e-10)
    return metric, t_new, f_new


class Accuracy:
    """Stateful wrapper mirroring the PyTorch module (per-sample T/F accumulators)."""

    def __init__(self):
        self.T = 0.0
        self.F = 0.0

    def reset(self):
        self.T = 0.0
        self.F = 0.0

    def __call__(self, output, target):
        n = output.shape[0]
        if isinstance(self.T, (float, int)):
            # PyTorch starts from scalar 0.0; broadcast to per-sample vectors.
            t_prev = jnp.full((n,), self.T, jnp.float32)
            f_prev = jnp.full((n,), self.F, jnp.float32)
        else:
            # Note: like the PyTorch original, a later call with a different
            # batch size is a shape error once the accumulators are vectors.
            t_prev, f_prev = self.T, self.F
        metric, self.T, self.F = _accuracy_step(
            output, target.astype(jnp.int32), t_prev, f_prev)
        return metric


if __name__ == "__main__":
    key = jax.random.PRNGKey(0)
    k1, k2, k3, k4 = jax.random.split(key, 4)

    # Test 1: kernel path.  N=300 is not a multiple of the 128-row tile, so it
    # exercises the un-padded partial trailing logits block; two calls
    # exercise the T/F accumulation.
    N, C = 300, 160
    output = jax.random.normal(k1, (N, C), dtype=jnp.float32)
    target = jax.random.randint(k2, (N,), 0, C, dtype=jnp.int32)

    acc = Accuracy()
    metric = jax.block_until_ready(acc(output, target))

    eq_ref = (jnp.argmax(output, axis=1) == target).astype(jnp.float32)
    ref1 = eq_ref / (eq_ref + (1.0 - eq_ref) + 1e-10)
    assert metric.shape == (N,)
    assert jnp.allclose(metric, ref1, atol=1e-6), (metric, ref1)

    metric2 = jax.block_until_ready(acc(output, target))
    ref2 = (2.0 * eq_ref) / (2.0 + 1e-10)
    assert jnp.allclose(metric2, ref2, atol=1e-6), (metric2, ref2)

    # Test 2: tiny-problem bypass path (C < 128 -> plain jnp.argmax).
    N2, C2 = 8, 10
    output2 = jax.random.normal(k3, (N2, C2), dtype=jnp.float32)
    target2 = jax.random.randint(k4, (N2,), 0, C2, dtype=jnp.int32)

    acc2 = Accuracy()
    metric3 = jax.block_until_ready(acc2(output2, target2))
    eq_ref2 = (jnp.argmax(output2, axis=1) == target2).astype(jnp.float32)
    ref3 = eq_ref2 / (eq_ref2 + (1.0 - eq_ref2) + 1e-10)
    assert metric3.shape == (N2,)
    assert jnp.allclose(metric3, ref3, atol=1e-6), (metric3, ref3)

    print("KERNEL_OK")
</pallas_src>

<mosaic_0001>
module attributes {stable_mosaic.version = 11 : i64} {
  func.func @_accuracy_kernel(%arg0: i32, %arg1: memref<128x160xf32, #tpu.memory_space<vmem>>, %arg2: memref<1x128xi32, #tpu.memory_space<vmem>>, %arg3: memref<1x128xf32, #tpu.memory_space<vmem>>) attributes {dimension_semantics = [#tpu.dimension_semantics<parallel>], iteration_bounds = array<i64: 3>, scalar_prefetch = 0 : i64, scratch_operands = 0 : i64, tpu.core_type = #tpu.core_type<tc>, window_params = [{transform_indices = @transform_0, window_bounds = array<i64: 128, 160>}, {transform_indices = @transform_1, window_bounds = array<i64: 1, 128>}, {transform_indices = @transform_2, window_bounds = array<i64: 1, 128>}]} {
    %c0 = arith.constant 0 : index
    %c0_0 = arith.constant 0 : index
    %0 = vector.load %arg1[%c0, %c0_0] : memref<128x160xf32, #tpu.memory_space<vmem>>, vector<128x160xf32>
    %cst = arith.constant dense<0xFF800000> : vector<128xf32>
    %1 = vector.multi_reduction <maximumf>, %0, %cst [1] : vector<128x160xf32> to vector<128xf32>
    %2 = vector.shape_cast %1 : vector<128xf32> to vector<128x1xf32>
    %3 = tpu.iota {dimensions = array<i32: 1>} : vector<128x160xi32>
    %4 = vector.broadcast %2 : vector<128x1xf32> to vector<128x160xf32>
    %5 = arith.cmpf oeq, %0, %4 : vector<128x160xf32>
    %c160_i32 = arith.constant 160 : i32
    %6 = vector.broadcast %c160_i32 : i32 to vector<128x160xi32>
    %7 = arith.select %5, %3, %6 : vector<128x160xi1>, vector<128x160xi32>
    %cst_1 = arith.constant dense<2147483647> : vector<128xi32>
    %8 = vector.multi_reduction <minsi>, %7, %cst_1 [1] : vector<128x160xi32> to vector<128xi32>
    %9 = vector.shape_cast %8 : vector<128xi32> to vector<128x1xi32>
    %10 = arith.sitofp %9 : vector<128x1xi32> to vector<128x1xf32>
    %11 = vector.shape_cast %10 : vector<128x1xf32> to vector<128x1xf32>
    %12 = vector.broadcast %11 : vector<128x1xf32> to vector<128x128xf32>
    %13 = tpu.transpose %12, [1, 0] : vector<128x128xf32> -> vector<128x128xf32>
    %14 = vector.extract_strided_slice %13 {offsets = [0, 0], sizes = [1, 128], strides = [1, 1]} : vector<128x128xf32> to vector<1x128xf32>
    %c0_2 = arith.constant 0 : index
    %c0_3 = arith.constant 0 : index
    %15 = vector.load %arg2[%c0_2, %c0_3] : memref<1x128xi32, #tpu.memory_space<vmem>>, vector<1x128xi32>
    %16 = arith.sitofp %15 : vector<1x128xi32> to vector<1x128xf32>
    %17 = arith.cmpf oeq, %14, %16 : vector<1x128xf32>
    %18 = arith.extui %17 : vector<1x128xi1> to vector<1x128xi32>
    %19 = arith.sitofp %18 : vector<1x128xi32> to vector<1x128xf32>
    %c0_4 = arith.constant 0 : index
    %c0_5 = arith.constant 0 : index
    %20 = vector.load %arg3[%c0_4, %c0_5] : memref<1x128xf32, #tpu.memory_space<vmem>>, vector<1x128xf32>
    tpu.vector_store %arg3[%c0_4, %c0_5], %19 {strides = array<i32>} : memref<1x128xf32, #tpu.memory_space<vmem>>, vector<1x128xf32>,
    return
  }
  func.func @transform_0(%arg0: i32) -> (i32, i32) {
    %c0_i32 = arith.constant 0 : i32
    %c0_i32_0 = arith.constant 0 : i32
    return %arg0, %c0_i32 : i32, i32
  }
  func.func @transform_1(%arg0: i32) -> (i32, i32) {
    %c0_i32 = arith.constant 0 : i32
    %c0_i32_0 = arith.constant 0 : i32
    return %c0_i32, %arg0 : i32, i32
  }
  func.func @transform_2(%arg0: i32) -> (i32, i32) {
    %c0_i32 = arith.constant 0 : i32
    %c0_i32_0 = arith.constant 0 : i32
    return %c0_i32, %arg0 : i32, i32
  }
}

</mosaic_0001>

<llo_original>
// kernel: _accuracy_step.1
$region0: #{_accuracy_step.1}
  #allocation0 [shape = 'u32[]', space=smem, size = 0x4, offset = 0x4, fixed_abs, tag = 'smem constant byte address 0x4 - core index']
  #allocation1 [shape = 'u32[144,128]{1,0:T(1,128)}', space=vmem, size = 0x12000, scoped, tag = 'internal scratch']
  %s0 = inlined_call_operand.vmem [shape: f32[300,160], index: 0, kind: input, shape index: {}]
  %s1 = inlined_call_operand.vmem [shape: s32[1,384], index: 1, kind: input, shape index: {}]
  %s2 = inlined_call_operand.vmem [shape: f32[1,384], index: 2, kind: output, shape index: {}]
  %s3 = sld [smem:[#allocation0]]
  $region41: #{_accuracy_step.1} parent=0
    _
  %s5 = ssub.s32 1, %s3
  %s6 = scalar_select 0, %s5, %s3
  loop: start=0, step=1, limit=5
  $region2: #{_accuracy_step.1} parent=0 // loop_pre_header
    _
  $region3: #{_accuracy_step.1} parent=0 // loop_header
    %s8 = sphi 0, %s12
    %p9 = scmp.ge.s32.totalorder %s8, 5
    %s18 = sphi 0, %s20
    %s21 = sphi 0, %s18
    %s22 = sphi 0, %s21
    %s38 = sphi 0, %s22
    %s44 = sphi 0, %s46
    %s47 = sphi 0, %s44
    %s48 = sphi 0, %s47
    %s64 = sphi 0, %s48
    %s70 = sphi 0, %s72
    %s73 = sphi 0, %s70
    %s74 = sphi 0, %s73
    %s90 = sphi 0, %s74
  $region4: #{_accuracy_step.1} parent=0 // loop_header_branch
    %11 = sbr.rel (%p9) target = $region8
  $region5: #{_accuracy_step.1} parent=0 // loop_body
    %s13 = ssub.s32 %s8, 1
    %s14 = ssub.s32 %s8, 2
    %s15 = sadd.s32 %s8, 1
    %s16 = ssub.s32 %s8, %s15
    %p17 = scmp.eq.s32.totalorder %s16, 0
    %s19 = sadd.s32 %s18, 1
    %s20 = scalar_select %p17, %s18, %s19
    %p23 = pneg %p17
    %p24 = scmp.eq.s32.totalorder %s8, 2
    %p25 = por %p23, %p24
    %p26 = scmp.ne.s32.totalorder %s18, %s21
    %p27 = scmp.eq.s32.totalorder %s8, 0
    %p28 = por %p26, %p27
    %p29 = scmp.ne.s32.totalorder %s18, %s21
    %p30 = scmp.eq.s32.totalorder %s13, 2
    %p31 = por %p29, %p30
    %p32 = scmp.ne.s32.totalorder %s21, %s22
    %p33 = scmp.eq.s32.totalorder %s13, 0
    %p34 = por %p32, %p33
    %p35 = scmp.ne.s32.totalorder %s21, %s22
    %p36 = scmp.eq.s32.totalorder %s14, 2
    %p37 = por %p35, %p36
    %p39 = scmp.ne.s32.totalorder %s22, %s38
    %p40 = scmp.eq.s32.totalorder %s14, 0
    %p41 = por %p39, %p40
    %s42 = ssub.s32 %s8, %s15
    %p43 = scmp.eq.s32.totalorder %s42, 0
    %s45 = sadd.s32 %s44, 1
    %s46 = scalar_select %p43, %s44, %s45
    %p49 = pneg %p43
    %p50 = scmp.eq.s32.totalorder %s8, 2
    %p51 = por %p49, %p50
    %p52 = scmp.ne.s32.totalorder %s44, %s47
    %p53 = scmp.eq.s32.totalorder %s8, 0
    %p54 = por %p52, %p53
    %p55 = scmp.ne.s32.totalorder %s44, %s47
    %p56 = scmp.eq.s32.totalorder %s13, 2
    %p57 = por %p55, %p56
    %p58 = scmp.ne.s32.totalorder %s47, %s48
    %p59 = scmp.eq.s32.totalorder %s13, 0
    %p60 = por %p58, %p59
    %p61 = scmp.ne.s32.totalorder %s47, %s48
    %p62 = scmp.eq.s32.totalorder %s14, 2
    %p63 = por %p61, %p62
    %p65 = scmp.ne.s32.totalorder %s48, %s64
    %p66 = scmp.eq.s32.totalorder %s14, 0
    %p67 = por %p65, %p66
    %s68 = ssub.s32 %s8, %s15
    %p69 = scmp.eq.s32.totalorder %s68, 0
    %s71 = sadd.s32 %s70, 1
    %s72 = scalar_select %p69, %s70, %s71
    %p75 = pneg %p69
    %p76 = scmp.eq.s32.totalorder %s8, 2
    %p77 = por %p75, %p76
    %p78 = scmp.ne.s32.totalorder %s70, %s73
    %p79 = scmp.eq.s32.totalorder %s8, 0
    %p80 = por %p78, %p79
    %p81 = scmp.ne.s32.totalorder %s70, %s73
    %p82 = scmp.eq.s32.totalorder %s13, 2
    %p83 = por %p81, %p82
    %p84 = scmp.ne.s32.totalorder %s73, %s74
    %p85 = scmp.eq.s32.totalorder %s13, 0
    %p86 = por %p84, %p85
    %p87 = scmp.ne.s32.totalorder %s73, %s74
    %p88 = scmp.eq.s32.totalorder %s14, 2
    %p89 = por %p87, %p88
    %p91 = scmp.ne.s32.totalorder %s74, %s90
    %p92 = scmp.eq.s32.totalorder %s14, 0
    %p93 = por %p91, %p92
    %p94 = scmp.le.s32.totalorder 1, %s8
    %p95 = scmp.lt.s32.totalorder %s8, 4
    %p96 = pnand %p94, %p95
    %p97 = pneg %p96
    // Predicated region
    $region9: #{_accuracy_step.1} parent=5 // pred_check
      _
    $region10: #{_accuracy_step.1} parent=5 // pred_check_branch
      %99 = sbr.rel (%p96) target = $region12
    $region11: #{_accuracy_step.1} parent=5 // pred_region
      %s100 = ssub.s32 %s8, 1
    $region12: #{_accuracy_step.1} parent=5 // pred_fallthru
      _
    %p101 = scmp.lt.s32.totalorder %s8, 3
    // Predicated region
    $region13: #{_accuracy_step.1} parent=5 // pred_check
      %p102 = pneg %p101
    $region14: #{_accuracy_step.1} parent=5 // pred_check_branch
      %104 = sbr.rel (%p102) target = $region16
    $region15: #{_accuracy_step.1} parent=5 // pred_region
      // Predicated region
      $region17: #{_accuracy_step.1} parent=15 // pred_check
        %p105 = pneg %p28
      $region18: #{_accuracy_step.1} parent=15 // pred_check_branch
        %107 = sbr.rel (%p105) target = $region20
      $region19: #{_accuracy_step.1} parent=15 // pred_region
        %s108 = smul.u32 16, %s8
        %s109 = ssub.s32 38, %s108
        %p110 = scmp.lt.s32.totalorder %s109, 16
        %s111 = scalar_select %p110, %s109, 16
        %s112 = smul.u32 128, %s111
        %s113 = smul.u32 %s112, 2
        %p114 = scmp.lt.s32.totalorder %s108, 37
        %s115 = scalar_select %p114, %s108, 37
        %s116 = smul.addr %s115, 2
        %s117 = smul.addr %s116, 8
        %s118 = scalar_lea.vmem %s0, %s117
        %s119 = smul.u32 16, %s8
        %s120 = ssub.s32 38, %s119
        %p121 = scmp.lt.s32.totalorder %s120, 16
        %s122 = scalar_select %p121, %s120, 16
        %s123 = smul.u32 128, %s122
        %s124 = smul.u32 %s123, 2
      $region20: #{_accuracy_step.1} parent=15 // pred_fallthru
        _
      // Predicated region
      $region21: #{_accuracy_step.1} parent=15 // pred_check
        %p125 = pneg %p54
      $region22: #{_accuracy_step.1} parent=15 // pred_check_branch
        %127 = sbr.rel (%p125) target = $region24
      $region23: #{_accuracy_step.1} parent=15 // pred_region
        %p128 = scmp.lt.s32.totalorder %s8, 2
        %s129 = scalar_select %p128, %s8, 2
        %s130 = scalar_lea.vmem %s1, %s129
      $region24: #{_accuracy_step.1} parent=15 // pred_fallthru
        _
    $region16: #{_accuracy_step.1} parent=5 // pred_fallthru
      _
    %p131 = scmp.le.s32.totalorder 1, %s8
    %p132 = scmp.lt.s32.totalorder %s8, 4
    %p133 = pnand %p131, %p132
    %p134 = pneg %p133
    // Predicated region
    $region25: #{_accuracy_step.1} parent=5 // pred_check
      _
    $region26: #{_accuracy_step.1} parent=5 // pred_check_branch
      %136 = sbr.rel (%p133) target = $region28
    $region27: #{_accuracy_step.1} parent=5 // pred_region
      %s137 = ssub.s32 %s8, 1
      %s138 = smul.u32 16, %s13
      %s139 = ssub.s32 38, %s138
      %p140 = scmp.lt.s32.totalorder %s139, 16
      %s141 = scalar_select %p140, %s139, 16
      %s142 = smul.u32 128, %s141
      %s143 = smul.u32 %s142, 2
      %p144 = scmp.lt.s32.totalorder %s138, 37
      %s145 = scalar_select %p144, %s138, 37
      %s146 = smul.addr %s145, 2
      %s147 = smul.addr %s146, 8
      %s148 = scalar_lea.vmem %s0, %s147
      %p149 = pneg %p34
      %p150 = pneg %p31
      %p151 = scmp.lt.s32.totalorder %s13, 2
      %s152 = scalar_select %p151, %s13, 2
      %s153 = scalar_lea.vmem %s1, %s152
      %p154 = pneg %p60
      %p155 = pneg %p57
      %p156 = pneg %p86
      %p157 = pneg %p83
      %p158 = scmp.lt.s32.totalorder %s13, 2
      %s159 = scalar_select %p158, %s13, 2
      %s160 = scalar_lea.vmem %s2, %s159
      %s161 = smul.u32 16, %s13
      %s162 = ssub.s32 38, %s161
      %p163 = scmp.lt.s32.totalorder %s162, 16
      %s164 = scalar_select %p163, %s162, 16
      %s165 = smul.u32 128, %s164
      %s166 = smul.u32 %s165, 2
      %p167 = scmp.lt.s32.totalorder %s161, 37
      %s168 = scalar_select %p167, %s161, 37
      %s169 = smul.addr %s168, 2
      %s170 = smul.addr %s169, 8
      %s171 = scalar_lea.vmem %s0, %s170
      %s172 = smul.u32 16, %s13
      %s173 = ssub.s32 38, %s172
      %p174 = scmp.lt.s32.totalorder %s173, 16
      %s175 = scalar_select %p174, %s173, 16
      %s176 = smul.u32 128, %s175
      %s177 = smul.u32 %s176, 2
      %p178 = scmp.lt.s32.totalorder %s13, 2
      %s179 = scalar_select %p178, %s13, 2
      %s180 = scalar_lea.vmem %s1, %s179
      %p181 = scmp.lt.s32.totalorder %s13, 2
      %s182 = scalar_select %p181, %s13, 2
      %s183 = scalar_lea.vmem %s2, %s182
      %v184 = vld [vmem:[%s171] sm:$0xff]
      %v185 = vld [vmem:[%s171 + $0x8] sm:$0xff]
      %v186 = vld [vmem:[%s171 + $0x10] sm:$0xff]
      %v187 = vld [vmem:[%s171 + $0x18] sm:$0xff]
      %v188 = vld [vmem:[%s171 + $0x20] sm:$0xff]
      %v189 = vld [vmem:[%s171 + $0x28] sm:$0xff]
      %v190 = vld [vmem:[%s171 + $0x30] sm:$0xff]
      %v191 = vld [vmem:[%s171 + $0x38] sm:$0xff]
      %v192 = vld [vmem:[%s171 + $0x40] sm:$0xff]
      %v193 = vld [vmem:[%s171 + $0x48] sm:$0xff]
      %v194 = vld [vmem:[%s171 + $0x50] sm:$0xff]
      %v195 = vld [vmem:[%s171 + $0x58] sm:$0xff]
      %v196 = vld [vmem:[%s171 + $0x60] sm:$0xff]
      %v197 = vld [vmem:[%s171 + $0x68] sm:$0xff]
      %v198 = vld [vmem:[%s171 + $0x70] sm:$0xff]
      %v199 = vld [vmem:[%s171 + $0x78] sm:$0xff]
      %v200 = vld [vmem:[%s171 + $0x80] sm:$0xff]
      %v201 = vld [vmem:[%s171 + $0x88] sm:$0xff]
      %v202 = vld [vmem:[%s171 + $0x90] sm:$0xff]
      %v203 = vld [vmem:[%s171 + $0x98] sm:$0xff]
      %v204 = vld [vmem:[%s171 + $0xa0] sm:$0xff]
      %v205 = vld [vmem:[%s171 + $0xa8] sm:$0xff]
      %v206 = vld [vmem:[%s171 + $0xb0] sm:$0xff]
      %v207 = vld [vmem:[%s171 + $0xb8] sm:$0xff]
      %v208 = vld [vmem:[%s171 + $0xc0] sm:$0xff]
      %v209 = vld [vmem:[%s171 + $0xc8] sm:$0xff]
      %v210 = vld [vmem:[%s171 + $0xd0] sm:$0xff]
      %v211 = vld [vmem:[%s171 + $0xd8] sm:$0xff]
      %v212 = vld [vmem:[%s171 + $0xe0] sm:$0xff]
      %v213 = vld [vmem:[%s171 + $0xe8] sm:$0xff]
      %v214 = vld [vmem:[%s171 + $0xf0] sm:$0xff]
      %v215 = vld [vmem:[%s171 + $0xf8] sm:$0xff]
      %vm216 = vcmask 261120
      %v217 = vsel %vm216, %v185, -inf
      %v218 = vmax.f32 %v184, %v217
      %219 = vmax.xlane.f32.xlu0 %v218
      %v220 = vpop.xlane.xlu0 %219
      %v221 = vsel %vm216, %v187, -inf
      %v222 = vmax.f32 %v186, %v221
      %223 = vmax.xlane.f32.xlu0 %v222
      %v224 = vpop.xlane.xlu0 %223
      %v225 = vsel %vm216, %v189, -inf
      %v226 = vmax.f32 %v188, %v225
      %227 = vmax.xlane.f32.xlu0 %v226
      %v228 = vpop.xlane.xlu0 %227
      %v229 = vsel %vm216, %v191, -inf
      %v230 = vmax.f32 %v190, %v229
      %231 = vmax.xlane.f32.xlu0 %v230
      %v232 = vpop.xlane.xlu0 %231
      %v233 = vsel %vm216, %v193, -inf
      %v234 = vmax.f32 %v192, %v233
      %235 = vmax.xlane.f32.xlu0 %v234
      %v236 = vpop.xlane.xlu0 %235
      %v237 = vsel %vm216, %v195, -inf
      %v238 = vmax.f32 %v194, %v237
      %239 = vmax.xlane.f32.xlu0 %v238
      %v240 = vpop.xlane.xlu0 %239
      %v241 = vsel %vm216, %v197, -inf
      %v242 = vmax.f32 %v196, %v241
      %243 = vmax.xlane.f32.xlu0 %v242
      %v244 = vpop.xlane.xlu0 %243
      %v245 = vsel %vm216, %v199, -inf
      %v246 = vmax.f32 %v198, %v245
      %247 = vmax.xlane.f32.xlu0 %v246
      %v248 = vpop.xlane.xlu0 %247
      %v249 = vsel %vm216, %v201, -inf
      %v250 = vmax.f32 %v200, %v249
      %251 = vmax.xlane.f32.xlu0 %v250
      %v252 = vpop.xlane.xlu0 %251
      %v253 = vsel %vm216, %v203, -inf
      %v254 = vmax.f32 %v202, %v253
      %255 = vmax.xlane.f32.xlu0 %v254
      %v256 = vpop.xlane.xlu0 %255
      %v257 = vsel %vm216, %v205, -inf
      %v258 = vmax.f32 %v204, %v257
      %259 = vmax.xlane.f32.xlu0 %v258
      %v260 = vpop.xlane.xlu0 %259
      %v261 = vsel %vm216, %v207, -inf
      %v262 = vmax.f32 %v206, %v261
      %263 = vmax.xlane.f32.xlu0 %v262
      %v264 = vpop.xlane.xlu0 %263
      %v265 = vsel %vm216, %v209, -inf
      %v266 = vmax.f32 %v208, %v265
      %267 = vmax.xlane.f32.xlu0 %v266
      %v268 = vpop.xlane.xlu0 %267
      %v269 = vsel %vm216, %v211, -inf
      %v270 = vmax.f32 %v210, %v269
      %271 = vmax.xlane.f32.xlu0 %v270
      %v272 = vpop.xlane.xlu0 %271
      %v273 = vsel %vm216, %v213, -inf
      %v274 = vmax.f32 %v212, %v273
      %275 = vmax.xlane.f32.xlu0 %v274
      %v276 = vpop.xlane.xlu0 %275
      %v277 = vsel %vm216, %v215, -inf
      %v278 = vmax.f32 %v214, %v277
      %279 = vmax.xlane.f32.xlu0 %v278
      %v280 = vpop.xlane.xlu0 %279
      %v281 = vlaneseq
      %v282 = vand.u32 %v281, 127
      %v283 = vadd.s32 %v282, 128
      %vm284 = vcmp.eq.f32.partialorder %v184, %v220
      %vm285 = vcmp.eq.f32.partialorder %v185, %v220
      %vm286 = vcmp.eq.f32.partialorder %v186, %v224
      %vm287 = vcmp.eq.f32.partialorder %v187, %v224
      %vm288 = vcmp.eq.f32.partialorder %v188, %v228
      %vm289 = vcmp.eq.f32.partialorder %v189, %v228
      %vm290 = vcmp.eq.f32.partialorder %v190, %v232
      %vm291 = vcmp.eq.f32.partialorder %v191, %v232
      %vm292 = vcmp.eq.f32.partialorder %v192, %v236
      %vm293 = vcmp.eq.f32.partialorder %v193, %v236
      %vm294 = vcmp.eq.f32.partialorder %v194, %v240
      %vm295 = vcmp.eq.f32.partialorder %v195, %v240
      %vm296 = vcmp.eq.f32.partialorder %v196, %v244
      %vm297 = vcmp.eq.f32.partialorder %v197, %v244
      %vm298 = vcmp.eq.f32.partialorder %v198, %v248
      %vm299 = vcmp.eq.f32.partialorder %v199, %v248
      %vm300 = vcmp.eq.f32.partialorder %v200, %v252
      %vm301 = vcmp.eq.f32.partialorder %v201, %v252
      %vm302 = vcmp.eq.f32.partialorder %v202, %v256
      %vm303 = vcmp.eq.f32.partialorder %v203, %v256
      %vm304 = vcmp.eq.f32.partialorder %v204, %v260
      %vm305 = vcmp.eq.f32.partialorder %v205, %v260
      %vm306 = vcmp.eq.f32.partialorder %v206, %v264
      %vm307 = vcmp.eq.f32.partialorder %v207, %v264
      %vm308 = vcmp.eq.f32.partialorder %v208, %v268
      %vm309 = vcmp.eq.f32.partialorder %v209, %v268
      %vm310 = vcmp.eq.f32.partialorder %v210, %v272
      %vm311 = vcmp.eq.f32.partialorder %v211, %v272
      %vm312 = vcmp.eq.f32.partialorder %v212, %v276
      %vm313 = vcmp.eq.f32.partialorder %v213, %v276
      %vm314 = vcmp.eq.f32.partialorder %v214, %v280
      %vm315 = vcmp.eq.f32.partialorder %v215, %v280
      %v316 = vsel %vm284, %v282, 160
      %v317 = vsel %vm285, %v283, 160
      %v318 = vsel %vm286, %v282, 160
      %v319 = vsel %vm287, %v283, 160
      %v320 = vsel %vm288, %v282, 160
      %v321 = vsel %vm289, %v283, 160
      %v322 = vsel %vm290, %v282, 160
      %v323 = vsel %vm291, %v283, 160
      %v324 = vsel %vm292, %v282, 160
      %v325 = vsel %vm293, %v283, 160
      %v326 = vsel %vm294, %v282, 160
      %v327 = vsel %vm295, %v283, 160
      %v328 = vsel %vm296, %v282, 160
      %v329 = vsel %vm297, %v283, 160
      %v330 = vsel %vm298, %v282, 160
      %v331 = vsel %vm299, %v283, 160
      %v332 = vsel %vm300, %v282, 160
      %v333 = vsel %vm301, %v283, 160
      %v334 = vsel %vm302, %v282, 160
      %v335 = vsel %vm303, %v283, 160
      %v336 = vsel %vm304, %v282, 160
      %v337 = vsel %vm305, %v283, 160
      %v338 = vsel %vm306, %v282, 160
      %v339 = vsel %vm307, %v283, 160
      %v340 = vsel %vm308, %v282, 160
      %v341 = vsel %vm309, %v283, 160
      %v342 = vsel %vm310, %v282, 160
      %v343 = vsel %vm311, %v283, 160
      %v344 = vsel %vm312, %v282, 160
      %v345 = vsel %vm313, %v283, 160
      %v346 = vsel %vm314, %v282, 160
      %v347 = vsel %vm315, %v283, 160
      %v348 = vsel %vm216, %v317, 2147483647
      %vm349 = vcmp.lt.s32.totalorder %v316, %v348
      %v350 = vsel %vm349, %v316, %v348
      %v351 = vand.u32 %v350, 65535
      %v352 = vshra.s32 %v350, 16
      %v353 = vcvt.s32.f32 %v351
      %v354 = vcvt.s32.f32 %v352
      %355 = vmin.xlane.f32.xlu0 %v354
      %v356 = vpop.xlane.xlu0 %355
      %vm357 = vcmp.eq.f32.partialorder %v354, %v356
      %v358 = vsel %vm357, %v353, inf
      %359 = vmin.xlane.f32.xlu0 %v358
      %v360 = vpop.xlane.xlu0 %359
      %v361 = vcvt.f32.s32 %v360
      %v362 = vcvt.f32.s32 %v356
      %v363 = vshll.u32 %v362, 16
      %v364 = vadd.s32 %v363, %v361
      %v365 = vsel %vm216, %v319, 2147483647
      %vm366 = vcmp.lt.s32.totalorder %v318, %v365
      %v367 = vsel %vm366, %v318, %v365
      %v368 = vand.u32 %v367, 65535
      %v369 = vshra.s32 %v367, 16
      %v370 = vcvt.s32.f32 %v368
      %v371 = vcvt.s32.f32 %v369
      %372 = vmin.xlane.f32.xlu0 %v371
      %v373 = vpop.xlane.xlu0 %372
      %vm374 = vcmp.eq.f32.partialorder %v371, %v373
      %v375 = vsel %vm374, %v370, inf
      %376 = vmin.xlane.f32.xlu0 %v375
      %v377 = vpop.xlane.xlu0 %376
      %v378 = vcvt.f32.s32 %v377
      %v379 = vcvt.f32.s32 %v373
      %v380 = vshll.u32 %v379, 16
      %v381 = vadd.s32 %v380, %v378
      %v382 = vsel %vm216, %v321, 2147483647
      %vm383 = vcmp.lt.s32.totalorder %v320, %v382
      %v384 = vsel %vm383, %v320, %v382
      %v385 = vand.u32 %v384, 65535
      %v386 = vshra.s32 %v384, 16
      %v387 = vcvt.s32.f32 %v385
      %v388 = vcvt.s32.f32 %v386
      %389 = vmin.xlane.f32.xlu0 %v388
      %v390 = vpop.xlane.xlu0 %389
      %vm391 = vcmp.eq.f32.partialorder %v388, %v390
      %v392 = vsel %vm391, %v387, inf
      %393 = vmin.xlane.f32.xlu0 %v392
      %v394 = vpop.xlane.xlu0 %393
      %v395 = vcvt.f32.s32 %v394
      %v396 = vcvt.f32.s32 %v390
      %v397 = vshll.u32 %v396, 16
      %v398 = vadd.s32 %v397, %v395
      %v399 = vsel %vm216, %v323, 2147483647
      %vm400 = vcmp.lt.s32.totalorder %v322, %v399
      %v401 = vsel %vm400, %v322, %v399
      %v402 = vand.u32 %v401, 65535
      %v403 = vshra.s32 %v401, 16
      %v404 = vcvt.s32.f32 %v402
      %v405 = vcvt.s32.f32 %v403
      %406 = vmin.xlane.f32.xlu0 %v405
      %v407 = vpop.xlane.xlu0 %406
      %vm408 = vcmp.eq.f32.partialorder %v405, %v407
      %v409 = vsel %vm408, %v404, inf
      %410 = vmin.xlane.f32.xlu0 %v409
      %v411 = vpop.xlane.xlu0 %410
      %v412 = vcvt.f32.s32 %v411
      %v413 = vcvt.f32.s32 %v407
      %v414 = vshll.u32 %v413, 16
      %v415 = vadd.s32 %v414, %v412
      %v416 = vsel %vm216, %v325, 2147483647
      %vm417 = vcmp.lt.s32.totalorder %v324, %v416
      %v418 = vsel %vm417, %v324, %v416
      %v419 = vand.u32 %v418, 65535
      %v420 = vshra.s32 %v418, 16
      %v421 = vcvt.s32.f32 %v419
      %v422 = vcvt.s32.f32 %v420
      %423 = vmin.xlane.f32.xlu0 %v422
      %v424 = vpop.xlane.xlu0 %423
      %vm425 = vcmp.eq.f32.partialorder %v422, %v424
      %v426 = vsel %vm425, %v421, inf
      %427 = vmin.xlane.f32.xlu0 %v426
      %v428 = vpop.xlane.xlu0 %427
      %v429 = vcvt.f32.s32 %v428
      %v430 = vcvt.f32.s32 %v424
      %v431 = vshll.u32 %v430, 16
      %v432 = vadd.s32 %v431, %v429
      %v433 = vsel %vm216, %v327, 2147483647
      %vm434 = vcmp.lt.s32.totalorder %v326, %v433
      %v435 = vsel %vm434, %v326, %v433
      %v436 = vand.u32 %v435, 65535
      %v437 = vshra.s32 %v435, 16
      %v438 = vcvt.s32.f32 %v436
      %v439 = vcvt.s32.f32 %v437
      %440 = vmin.xlane.f32.xlu0 %v439
      %v441 = vpop.xlane.xlu0 %440
      %vm442 = vcmp.eq.f32.partialorder %v439, %v441
      %v443 = vsel %vm442, %v438, inf
      %444 = vmin.xlane.f32.xlu0 %v443
      %v445 = vpop.xlane.xlu0 %444
      %v446 = vcvt.f32.s32 %v445
      %v447 = vcvt.f32.s32 %v441
      %v448 = vshll.u32 %v447, 16
      %v449 = vadd.s32 %v448, %v446
      %v450 = vsel %vm216, %v329, 2147483647
      %vm451 = vcmp.lt.s32.totalorder %v328, %v450
      %v452 = vsel %vm451, %v328, %v450
      %v453 = vand.u32 %v452, 65535
      %v454 = vshra.s32 %v452, 16
      %v455 = vcvt.s32.f32 %v453
      %v456 = vcvt.s32.f32 %v454
      %457 = vmin.xlane.f32.xlu0 %v456
      %v458 = vpop.xlane.xlu0 %457
      %vm459 = vcmp.eq.f32.partialorder %v456, %v458
      %v460 = vsel %vm459, %v455, inf
      %461 = vmin.xlane.f32.xlu0 %v460
      %v462 = vpop.xlane.xlu0 %461
      %v463 = vcvt.f32.s32 %v462
      %v464 = vcvt.f32.s32 %v458
      %v465 = vshll.u32 %v464, 16
      %v466 = vadd.s32 %v465, %v463
      %v467 = vsel %vm216, %v331, 2147483647
      %vm468 = vcmp.lt.s32.totalorder %v330, %v467
      %v469 = vsel %vm468, %v330, %v467
      %v470 = vand.u32 %v469, 65535
      %v471 = vshra.s32 %v469, 16
      %v472 = vcvt.s32.f32 %v470
      %v473 = vcvt.s32.f32 %v471
      %474 = vmin.xlane.f32.xlu0 %v473
      %v475 = vpop.xlane.xlu0 %474
      %vm476 = vcmp.eq.f32.partialorder %v473, %v475
      %v477 = vsel %vm476, %v472, inf
      %478 = vmin.xlane.f32.xlu0 %v477
      %v479 = vpop.xlane.xlu0 %478
      %v480 = vcvt.f32.s32 %v479
      %v481 = vcvt.f32.s32 %v475
      %v482 = vshll.u32 %v481, 16
      %v483 = vadd.s32 %v482, %v480
      %v484 = vsel %vm216, %v333, 2147483647
      %vm485 = vcmp.lt.s32.totalorder %v332, %v484
      %v486 = vsel %vm485, %v332, %v484
      %v487 = vand.u32 %v486, 65535
      %v488 = vshra.s32 %v486, 16
      %v489 = vcvt.s32.f32 %v487
      %v490 = vcvt.s32.f32 %v488
      %491 = vmin.xlane.f32.xlu0 %v490
      %v492 = vpop.xlane.xlu0 %491
      %vm493 = vcmp.eq.f32.partialorder %v490, %v492
      %v494 = vsel %vm493, %v489, inf
      %495 = vmin.xlane.f32.xlu0 %v494
      %v496 = vpop.xlane.xlu0 %495
      %v497 = vcvt.f32.s32 %v496
      %v498 = vcvt.f32.s32 %v492
      %v499 = vshll.u32 %v498, 16
      %v500 = vadd.s32 %v499, %v497
      %v501 = vsel %vm216, %v335, 2147483647
      %vm502 = vcmp.lt.s32.totalorder %v334, %v501
      %v503 = vsel %vm502, %v334, %v501
      %v504 = vand.u32 %v503, 65535
      %v505 = vshra.s32 %v503, 16
      %v506 = vcvt.s32.f32 %v504
      %v507 = vcvt.s32.f32 %v505
      %508 = vmin.xlane.f32.xlu0 %v507
      %v509 = vpop.xlane.xlu0 %508
      %vm510 = vcmp.eq.f32.partialorder %v507, %v509
      %v511 = vsel %vm510, %v506, inf
      %512 = vmin.xlane.f32.xlu0 %v511
      %v513 = vpop.xlane.xlu0 %512
      %v514 = vcvt.f32.s32 %v513
      %v515 = vcvt.f32.s32 %v509
      %v516 = vshll.u32 %v515, 16
      %v517 = vadd.s32 %v516, %v514
      %v518 = vsel %vm216, %v337, 2147483647
      %vm519 = vcmp.lt.s32.totalorder %v336, %v518
      %v520 = vsel %vm519, %v336, %v518
      %v521 = vand.u32 %v520, 65535
      %v522 = vshra.s32 %v520, 16
      %v523 = vcvt.s32.f32 %v521
      %v524 = vcvt.s32.f32 %v522
      %525 = vmin.xlane.f32.xlu0 %v524
      %v526 = vpop.xlane.xlu0 %525
      %vm527 = vcmp.eq.f32.partialorder %v524, %v526
      %v528 = vsel %vm527, %v523, inf
      %529 = vmin.xlane.f32.xlu0 %v528
      %v530 = vpop.xlane.xlu0 %529
      %v531 = vcvt.f32.s32 %v530
      %v532 = vcvt.f32.s32 %v526
      %v533 = vshll.u32 %v532, 16
      %v534 = vadd.s32 %v533, %v531
      %v535 = vsel %vm216, %v339, 2147483647
      %vm536 = vcmp.lt.s32.totalorder %v338, %v535
      %v537 = vsel %vm536, %v338, %v535
      %v538 = vand.u32 %v537, 65535
      %v539 = vshra.s32 %v537, 16
      %v540 = vcvt.s32.f32 %v538
      %v541 = vcvt.s32.f32 %v539
      %542 = vmin.xlane.f32.xlu0 %v541
      %v543 = vpop.xlane.xlu0 %542
      %vm544 = vcmp.eq.f32.partialorder %v541, %v543
      %v545 = vsel %vm544, %v540, inf
      %546 = vmin.xlane.f32.xlu0 %v545
      %v547 = vpop.xlane.xlu0 %546
      %v548 = vcvt.f32.s32 %v547
      %v549 = vcvt.f32.s32 %v543
      %v550 = vshll.u32 %v549, 16
      %v551 = vadd.s32 %v550, %v548
      %v552 = vsel %vm216, %v341, 2147483647
      %vm553 = vcmp.lt.s32.totalorder %v340, %v552
      %v554 = vsel %vm553, %v340, %v552
      %v555 = vand.u32 %v554, 65535
      %v556 = vshra.s32 %v554, 16
      %v557 = vcvt.s32.f32 %v555
      %v558 = vcvt.s32.f32 %v556
      %559 = vmin.xlane.f32.xlu0 %v558
      %v560 = vpop.xlane.xlu0 %559
      %vm561 = vcmp.eq.f32.partialorder %v558, %v560
      %v562 = vsel %vm561, %v557, inf
      %563 = vmin.xlane.f32.xlu0 %v562
      %v564 = vpop.xlane.xlu0 %563
      %v565 = vcvt.f32.s32 %v564
      %v566 = vcvt.f32.s32 %v560
      %v567 = vshll.u32 %v566, 16
      %v568 = vadd.s32 %v567, %v565
      %v569 = vsel %vm216, %v343, 2147483647
      %vm570 = vcmp.lt.s32.totalorder %v342, %v569
      %v571 = vsel %vm570, %v342, %v569
      %v572 = vand.u32 %v571, 65535
      %v573 = vshra.s32 %v571, 16
      %v574 = vcvt.s32.f32 %v572
      %v575 = vcvt.s32.f32 %v573
      %576 = vmin.xlane.f32.xlu0 %v575
      %v577 = vpop.xlane.xlu0 %576
      %vm578 = vcmp.eq.f32.partialorder %v575, %v577
      %v579 = vsel %vm578, %v574, inf
      %580 = vmin.xlane.f32.xlu0 %v579
      %v581 = vpop.xlane.xlu0 %580
      %v582 = vcvt.f32.s32 %v581
      %v583 = vcvt.f32.s32 %v577
      %v584 = vshll.u32 %v583, 16
      %v585 = vadd.s32 %v584, %v582
      %v586 = vsel %vm216, %v345, 2147483647
      %vm587 = vcmp.lt.s32.totalorder %v344, %v586
      %v588 = vsel %vm587, %v344, %v586
      %v589 = vand.u32 %v588, 65535
      %v590 = vshra.s32 %v588, 16
      %v591 = vcvt.s32.f32 %v589
      %v592 = vcvt.s32.f32 %v590
      %593 = vmin.xlane.f32.xlu0 %v592
      %v594 = vpop.xlane.xlu0 %593
      %vm595 = vcmp.eq.f32.partialorder %v592, %v594
      %v596 = vsel %vm595, %v591, inf
      %597 = vmin.xlane.f32.xlu0 %v596
      %v598 = vpop.xlane.xlu0 %597
      %v599 = vcvt.f32.s32 %v598
      %v600 = vcvt.f32.s32 %v594
      %v601 = vshll.u32 %v600, 16
      %v602 = vadd.s32 %v601, %v599
      %v603 = vsel %vm216, %v347, 2147483647
      %vm604 = vcmp.lt.s32.totalorder %v346, %v603
      %v605 = vsel %vm604, %v346, %v603
      %v606 = vand.u32 %v605, 65535
      %v607 = vshra.s32 %v605, 16
      %v608 = vcvt.s32.f32 %v606
      %v609 = vcvt.s32.f32 %v607
      %610 = vmin.xlane.f32.xlu0 %v609
      %v611 = vpop.xlane.xlu0 %610
      %vm612 = vcmp.eq.f32.partialorder %v609, %v611
      %v613 = vsel %vm612, %v608, inf
      %614 = vmin.xlane.f32.xlu0 %v613
      %v615 = vpop.xlane.xlu0 %614
      %v616 = vcvt.f32.s32 %v615
      %v617 = vcvt.f32.s32 %v611
      %v618 = vshll.u32 %v617, 16
      %v619 = vadd.s32 %v618, %v616
      %v620 = vcvt.s32.f32 %v364
      %v621 = vcvt.s32.f32 %v381
      %v622 = vcvt.s32.f32 %v398
      %v623 = vcvt.s32.f32 %v415
      %v624 = vcvt.s32.f32 %v432
      %v625 = vcvt.s32.f32 %v449
      %v626 = vcvt.s32.f32 %v466
      %v627 = vcvt.s32.f32 %v483
      %v628 = vcvt.s32.f32 %v500
      %v629 = vcvt.s32.f32 %v517
      %v630 = vcvt.s32.f32 %v534
      %v631 = vcvt.s32.f32 %v551
      %v632 = vcvt.s32.f32 %v568
      %v633 = vcvt.s32.f32 %v585
      %v634 = vcvt.s32.f32 %v602
      %v635 = vcvt.s32.f32 %v619
      %636 = vxpose.xlu0.b32.start [1/16] %v620, 128
      %637 = vxpose.xlu0.b32.cont [2/16] %v621, 128
      %638 = vxpose.xlu0.b32.cont [3/16] %v622, 128
      %639 = vxpose.xlu0.b32.cont [4/16] %v623, 128
      %640 = vxpose.xlu0.b32.cont [5/16] %v624, 128
      %641 = vxpose.xlu0.b32.cont [6/16] %v625, 128
      %642 = vxpose.xlu0.b32.cont [7/16] %v626, 128
      %643 = vxpose.xlu0.b32.cont [8/16] %v627, 128
      %644 = vxpose.xlu0.b32.cont [9/16] %v628, 128
      %645 = vxpose.xlu0.b32.cont [10/16] %v629, 128
      %646 = vxpose.xlu0.b32.cont [11/16] %v630, 128
      %647 = vxpose.xlu0.b32.cont [12/16] %v631, 128
      %648 = vxpose.xlu0.b32.cont [13/16] %v632, 128
      %649 = vxpose.xlu0.b32.cont [14/16] %v633, 128
      %650 = vxpose.xlu0.b32.cont [15/16] %v634, 128
      %651 = vxpose.xlu0.b32.end [16/16] %v635, 128
      %v652 = vpop.trf.xlu0
      %v653 = vpop.trf.xlu0
      %v654 = vpop.trf.xlu0
      %v655 = vpop.trf.xlu0
      %v656 = vpop.trf.xlu0
      %v657 = vpop.trf.xlu0
      %v658 = vpop.trf.xlu0
      %v659 = vpop.trf.xlu0
      %v660 = vpop.trf.xlu0
      %v661 = vpop.trf.xlu0
      %v662 = vpop.trf.xlu0
      %v663 = vpop.trf.xlu0
      %v664 = vpop.trf.xlu0
      %v665 = vpop.trf.xlu0
      %v666 = vpop.trf.xlu0
      %v667 = vpop.trf.xlu0
      %v668 = vld [vmem:[%s180] sm:$0x1]
      %v669 = vcvt.s32.f32 %v668
      %vm670 = vcmp.eq.f32.partialorder %v652, %v669
      %v671 = vsel %vm670, 1, 0
      %v672 = vcvt.s32.f32 %v671
      %673 = vst [vmem:[%s183] sm:$0x1] %v672
      %p674 = scmp.lt.s32.totalorder %s13, 2
      %s675 = scalar_select %p674, %s13, 2
      %s676 = scalar_lea.vmem %s2, %s675
      // Predicated region
      $region29: #{_accuracy_step.1} parent=27 // pred_check
        %p677 = pneg %p83
      $region30: #{_accuracy_step.1} parent=27 // pred_check_branch
        %679 = sbr.rel (%p677) target = $region32
      $region31: #{_accuracy_step.1} parent=27 // pred_region
        _
      $region32: #{_accuracy_step.1} parent=27 // pred_fallthru
        _
    $region28: #{_accuracy_step.1} parent=5 // pred_fallthru
      _
    %p680 = scmp.le.s32.totalorder 2, %s8
    // Predicated region
    $region33: #{_accuracy_step.1} parent=5 // pred_check
      %p681 = pneg %p680
    $region34: #{_accuracy_step.1} parent=5 // pred_check_branch
      %683 = sbr.rel (%p681) target = $region36
    $region35: #{_accuracy_step.1} parent=5 // pred_region
      %s684 = ssub.s32 %s8, 2
      // Predicated region
      $region37: #{_accuracy_step.1} parent=35 // pred_check
        %p685 = pneg %p89
      $region38: #{_accuracy_step.1} parent=35 // pred_check_branch
        %687 = sbr.rel (%p685) target = $region40
      $region39: #{_accuracy_step.1} parent=35 // pred_region
        %p688 = scmp.lt.s32.totalorder %s14, 2
        %s689 = scalar_select %p688, %s14, 2
        %s690 = scalar_lea.vmem %s2, %s689
      $region40: #{_accuracy_step.1} parent=35 // pred_fallthru
        _
    $region36: #{_accuracy_step.1} parent=5 // pred_fallthru
      _
  $region6: #{_accuracy_step.1} parent=0 // loop_footer
    %s12 = sadd.s32 1, %s8
  $region7: #{_accuracy_step.1} parent=0 // loop_footer_branch
    %7 = sbr.rel target = $region3
  $region8: #{_accuracy_step.1} parent=0 // loop_exit
    _

</llo_original>
